<compile_context>
chip_gen: v7x
topology: tpu7x:2x2x1
jax: 0.10.0
libtpu: 0.0.40
codegen_flags: <defaults>
</compile_context>

<pallas_src>
import functools

import jax
import jax.numpy as jnp
from jax.experimental import pallas as pl
from jax.experimental.pallas import tpu as pltpu


# ----------------------------- kernel ---------------------------------------


def _mlp_kernel(x_ref, w1_ref, b1_ref, w2_ref, b2_ref, w3_ref, b3_ref, o_ref):
    """Transposed 3-layer MLP.  Shapes (Tb = batch tile on the lane axis):
       x_ref [D, Tb], w1 [128, D], b1 [128, 1], w2 [64, 128], b2 [64, 1],
       w3 [1, 64], b3 (1,1) scalar in SMEM, o_ref [1, Tb]."""
    cdt = w1_ref.dtype  # compute dtype fed to the MXU (bf16 or f32)

    # layer 1 + ReLU  -> [128, Tb]   (f32 accumulation, bias+ReLU in f32 on the VPU)
    h1 = jnp.dot(w1_ref[...], x_ref[...], preferred_element_type=jnp.float32)
    h1 = jnp.maximum(h1 + b1_ref[...], 0.0)

    # layer 2 + ReLU  -> [64, Tb]
    h2 = jnp.dot(w2_ref[...], h1.astype(cdt), preferred_element_type=jnp.float32)
    h2 = jnp.maximum(h2 + b2_ref[...], 0.0)

    # output layer    -> [1, Tb]  (lane-dense store)
    out = jnp.dot(w3_ref[...], h2.astype(cdt), preferred_element_type=jnp.float32)
    o_ref[...] = (out + b3_ref[0, 0]).astype(o_ref.dtype)


# ----------------------- tile / device heuristics ---------------------------


def _round_up(n, m):
    return ((n + m - 1) // m) * m


def _cdiv(a, b):
    return -(-a // b)


def _device_info():
    """(physical VMEM bytes per TensorCore, is multi-TensorCore chip)."""
    kind = ""
    try:
        kind = jax.devices()[0].device_kind.lower()
    except Exception:
        pass
    multi_tc = ("v7" in kind) or ("v4" in kind) or ("v5p" in kind)
    phys_vmem = (64 << 20) if "v7" in kind else (128 << 20)
    try:  # refine with the trace-time hardware query when available
        phys_vmem = int(pltpu.get_tpu_info().vmem_capacity_bytes)
    except Exception:
        pass
    return phys_vmem, multi_tc


def _tile_vmem_bytes(tile, d, cbytes):
    """Rough per-grid-step VMEM footprint (double-buffered blocks + intermediates)."""
    x_blocks = 2 * d * tile * cbytes               # double-buffered x^T tile
    out_blocks = 2 * 1 * tile * 4                  # double-buffered [1, Tb] f32 output
    inter = tile * (128 * 4 + 128 * cbytes         # h1 (f32) + h1 cast
                    + 64 * 4 + 64 * cbytes         # h2 (f32) + h2 cast
                    + 4)                           # out row
    weights = 2 * cbytes * (128 * d + 64 * 128 + 64) + 2 * 4 * (128 + 64)
    return x_blocks + out_blocks + inter + weights


def _choose_tile(batch, block_b, d, cbytes, phys_vmem, multi_tc):
    """Batch tile (multiple of 128) and grid length.

    - Largest tile <= block_b that fits a ~40% physical-VMEM budget.
    - On multi-TensorCore chips only: force >=2 tiles (and an even tile count) so the
      'parallel' grid axis shards evenly across both cores.  On single-TC v5e/v6e the
      batch runs in as few steps as possible."""
    b128 = _round_up(max(batch, 1), 128)
    tile = max(128, (int(block_b) // 128) * 128)
    tile = min(tile, b128)

    budget = min(int(phys_vmem * 0.4), 48 << 20)
    while tile > 128 and _tile_vmem_bytes(tile, d, cbytes) > budget:
        tile = max(128, ((tile // 2) // 128) * 128)

    if multi_tc and batch > 128 and _cdiv(b128, tile) < 2:
        tile = max(128, _round_up(_cdiv(b128, 2), 128))

    n_tiles = _cdiv(batch, tile)
    if multi_tc and n_tiles > 1 and (n_tiles % 2 == 1):
        n_tiles += 1  # balance the two TensorCores (extra tile is padded garbage, sliced off)
    return tile, n_tiles


# ----------------------------- wrapper ---------------------------------------


@functools.partial(jax.jit, static_argnames=("block_b", "compute_dtype"))
def improved_dlinear_forward(x, params, block_b=8192, compute_dtype=jnp.bfloat16):
    """x: [B, input_size] float32 -> [B, 1] float32.

    params = (w1, b1, w2, b2, w3, b3) in PyTorch layout: w_i [out, in], b_i [out].
    compute_dtype=jnp.bfloat16 (default) feeds the MXU in bf16 with f32 accumulation
    (~1e-2 relative error vs. the f32 reference); pass jnp.float32 for exact f32.
    """
    w1, b1, w2, b2, w3, b3 = params
    B, D = x.shape
    H1 = w1.shape[0]   # 128
    H2 = w2.shape[0]   # 64
    O = w3.shape[0]    # 1

    cdt = jnp.dtype(compute_dtype)
    cbytes = cdt.itemsize

    phys_vmem, multi_tc = _device_info()
    tile, n_tiles = _choose_tile(B, block_b, D, cbytes, phys_vmem, multi_tc)
    Bp = tile * n_tiles

    # Layout plumbing (single fused XLA op): batch onto the lane axis, zero-pad the
    # ragged tail only when needed, cast MXU inputs to the compute dtype.
    xT = x.T                                                       # [D, B]
    if Bp != B:
        xT = jnp.pad(xT, ((0, 0), (0, Bp - B)))
    if xT.dtype != cdt:
        xT = xT.astype(cdt)                                        # [D, Bp]
    w1c = w1.astype(cdt)                                           # [H1, D]
    w2c = w2.astype(cdt)                                           # [H2, H1]
    w3c = w3.astype(cdt)                                           # [O,  H2]
    b1c = b1.reshape(H1, 1).astype(jnp.float32)
    b2c = b2.reshape(H2, 1).astype(jnp.float32)
    b3c = b3.reshape(1, 1).astype(jnp.float32)

    vmem_limit = int(min(phys_vmem * 3 // 4,
                         max(32 << 20, 2 * _tile_vmem_bytes(tile, D, cbytes))))

    out_t = pl.pallas_call(
        _mlp_kernel,
        out_shape=jax.ShapeDtypeStruct((O, Bp), x.dtype),
        grid_spec=pltpu.PrefetchScalarGridSpec(
            num_scalar_prefetch=0,
            grid=(n_tiles,),
            in_specs=[
                pl.BlockSpec((D, tile), lambda i: (0, i)),          # x^T tile (lanes = batch)
                pl.BlockSpec((H1, D), lambda i: (0, 0)),            # w1 (grid-invariant)
                pl.BlockSpec((H1, 1), lambda i: (0, 0)),            # b1
                pl.BlockSpec((H2, H1), lambda i: (0, 0)),           # w2
                pl.BlockSpec((H2, 1), lambda i: (0, 0)),            # b2
                pl.BlockSpec((O, H2), lambda i: (0, 0)),            # w3
                pl.BlockSpec(memory_space=pltpu.MemorySpace.SMEM),  # b3 scalar in SMEM
            ],
            out_specs=pl.BlockSpec((O, tile), lambda i: (0, i)),    # lane-dense output
        ),
        compiler_params=pltpu.CompilerParams(
            dimension_semantics=("parallel",),
            vmem_limit_bytes=vmem_limit,
        ),
    )(xT, w1c, b1c, w2c, b2c, w3c, b3c)

    return out_t[0, :B].reshape(B, 1)


# ------------------------- reference & test ----------------------------------


def init_params(key, input_size):
    """PyTorch nn.Linear default init (uniform(-1/sqrt(fan_in), 1/sqrt(fan_in))),
    stored in PyTorch layout: weight [out, in], bias [out]."""
    dims = [(input_size, 128), (128, 64), (64, 1)]
    params = []
    for fan_in, fan_out in dims:
        key, kw, kb = jax.random.split(key, 3)
        bound = 1.0 / (fan_in ** 0.5)
        w = jax.random.uniform(kw, (fan_out, fan_in), jnp.float32, -bound, bound)
        b = jax.random.uniform(kb, (fan_out,), jnp.float32, -bound, bound)
        params.extend([w, b])
    return tuple(params)


def reference_forward(x, params):
    w1, b1, w2, b2, w3, b3 = params
    h1 = jnp.maximum(x @ w1.T + b1, 0.0)
    h2 = jnp.maximum(h1 @ w2.T + b2, 0.0)
    return h2 @ w3.T + b3


if __name__ == "__main__":
    key = jax.random.PRNGKey(0)
    k_in, k_in2, k_params = jax.random.split(key, 3)

    input_size = 8
    params = init_params(k_params, input_size)

    # --- small batch (single 128-row tile) ---
    x_small = jax.random.normal(k_in, (16, input_size), dtype=jnp.float32)
    y_ref_small = reference_forward(x_small, params)

    # exact-f32 compute path: tight tolerance vs. the f32 reference
    y_f32 = jax.block_until_ready(
        improved_dlinear_forward(x_small, params, compute_dtype=jnp.float32))
    assert y_f32.shape == (16, 1)
    assert jnp.allclose(y_f32, y_ref_small, atol=1e-4, rtol=1e-4), "f32 path mismatch"

    # default bf16-MXU / f32-accumulate path: tolerance appropriate for bf16 inputs
    y_bf16 = jax.block_until_ready(improved_dlinear_forward(x_small, params))
    assert y_bf16.shape == (16, 1)
    assert jnp.allclose(y_bf16, y_ref_small, atol=5e-2, rtol=5e-2), "bf16 path mismatch"

    # --- ragged batch: not a multiple of 128, exercises padding (single grid step
    #     on single-TC chips, even 2-way split on multi-TC chips) ---
    x_big = jax.random.normal(k_in2, (300, input_size), dtype=jnp.float32)
    y_ref_big = reference_forward(x_big, params)
    y_big = jax.block_until_ready(improved_dlinear_forward(x_big, params))
    assert y_big.shape == (300, 1)
    assert jnp.allclose(y_big, y_ref_big, atol=5e-2, rtol=5e-2), "ragged-batch mismatch"

    # --- force a small tile to exercise a multi-step grid + explicit vmem limit ---
    y_multi = jax.block_until_ready(
        improved_dlinear_forward(x_big, params, block_b=128))
    assert y_multi.shape == (300, 1)
    assert jnp.allclose(y_multi, y_ref_big, atol=5e-2, rtol=5e-2), "multi-tile mismatch"

    print("KERNEL_OK")
</pallas_src>

<mosaic_0001>
module attributes {stable_mosaic.version = 11 : i64} {
  func.func @_mlp_kernel(%arg0: i32, %arg1: memref<8x128xf32, #tpu.memory_space<vmem>>, %arg2: memref<128x8xf32, #tpu.memory_space<vmem>>, %arg3: memref<128x1xf32, #tpu.memory_space<vmem>>, %arg4: memref<64x128xf32, #tpu.memory_space<vmem>>, %arg5: memref<64x1xf32, #tpu.memory_space<vmem>>, %arg6: memref<1x64xf32, #tpu.memory_space<vmem>>, %arg7: memref<1x1xf32, #tpu.memory_space<smem>>, %arg8: memref<1x128xf32, #tpu.memory_space<vmem>>) attributes {dimension_semantics = [#tpu.dimension_semantics<parallel>], iteration_bounds = array<i64: 1>, scalar_prefetch = 0 : i64, scratch_operands = 0 : i64, tpu.core_type = #tpu.core_type<tc>, window_params = [{transform_indices = @transform_0, window_bounds = array<i64: 8, 128>}, {pipeline_mode = #tpu.pipeline_mode<synchronous>, transform_indices = @transform_1, window_bounds = array<i64: 128, 8>}, {pipeline_mode = #tpu.pipeline_mode<synchronous>, transform_indices = @transform_2, window_bounds = array<i64: 128, 1>}, {pipeline_mode = #tpu.pipeline_mode<synchronous>, transform_indices = @transform_3, window_bounds = array<i64: 64, 128>}, {pipeline_mode = #tpu.pipeline_mode<synchronous>, transform_indices = @transform_4, window_bounds = array<i64: 64, 1>}, {pipeline_mode = #tpu.pipeline_mode<synchronous>, transform_indices = @transform_5, window_bounds = array<i64: 1, 64>}, {transform_indices = @transform_6, window_bounds = array<i64: 1, 1>}, {transform_indices = @transform_7, window_bounds = array<i64: 1, 128>}]} {
    %c0 = arith.constant 0 : index
    %c0_0 = arith.constant 0 : index
    %0 = vector.load %arg2[%c0, %c0_0] : memref<128x8xf32, #tpu.memory_space<vmem>>, vector<128x8xf32>
    %c0_1 = arith.constant 0 : index
    %c0_2 = arith.constant 0 : index
    %1 = vector.load %arg1[%c0_1, %c0_2] : memref<8x128xf32, #tpu.memory_space<vmem>>, vector<8x128xf32>
    %cst = arith.constant dense<0.000000e+00> : vector<128x128xf32>
    %2 = tpu.matmul %0, %1, %cst {dimension_numbers = #tpu.dot_dimension_numbers<[1], [0], [0], [1], [0, 0, 1, 1], [], []>} : vector<128x8xf32>, vector<8x128xf32>, vector<128x128xf32> -> vector<128x128xf32>
    %c0_3 = arith.constant 0 : index
    %c0_4 = arith.constant 0 : index
    %3 = vector.load %arg3[%c0_3, %c0_4] : memref<128x1xf32, #tpu.memory_space<vmem>>, vector<128x1xf32>
    %4 = vector.broadcast %3 : vector<128x1xf32> to vector<128x128xf32>
    %5 = arith.addf %2, %4 : vector<128x128xf32>
    %cst_5 = arith.constant 0.000000e+00 : f32
    %6 = vector.broadcast %cst_5 : f32 to vector<128x128xf32>
    %7 = arith.maximumf %5, %6 : vector<128x128xf32>
    %c0_6 = arith.constant 0 : index
    %c0_7 = arith.constant 0 : index
    %8 = vector.load %arg4[%c0_6, %c0_7] : memref<64x128xf32, #tpu.memory_space<vmem>>, vector<64x128xf32>
    %cst_8 = arith.constant dense<0.000000e+00> : vector<64x128xf32>
    %9 = tpu.matmul %8, %7, %cst_8 {dimension_numbers = #tpu.dot_dimension_numbers<[1], [0], [0], [1], [0, 0, 1, 1], [], []>} : vector<64x128xf32>, vector<128x128xf32>, vector<64x128xf32> -> vector<64x128xf32>
    %c0_9 = arith.constant 0 : index
    %c0_10 = arith.constant 0 : index
    %10 = vector.load %arg5[%c0_9, %c0_10] : memref<64x1xf32, #tpu.memory_space<vmem>>, vector<64x1xf32>
    %11 = vector.broadcast %10 : vector<64x1xf32> to vector<64x128xf32>
    %12 = arith.addf %9, %11 : vector<64x128xf32>
    %cst_11 = arith.constant 0.000000e+00 : f32
    %13 = vector.broadcast %cst_11 : f32 to vector<64x128xf32>
    %14 = arith.maximumf %12, %13 : vector<64x128xf32>
    %c0_12 = arith.constant 0 : index
    %c0_13 = arith.constant 0 : index
    %15 = vector.load %arg6[%c0_12, %c0_13] : memref<1x64xf32, #tpu.memory_space<vmem>>, vector<1x64xf32>
    %cst_14 = arith.constant dense<0.000000e+00> : vector<1x128xf32>
    %16 = tpu.matmul %15, %14, %cst_14 {dimension_numbers = #tpu.dot_dimension_numbers<[1], [0], [0], [1], [0, 0, 1, 1], [], []>} : vector<1x64xf32>, vector<64x128xf32>, vector<1x128xf32> -> vector<1x128xf32>
    %c0_15 = arith.constant 0 : index
    %c0_16 = arith.constant 0 : index
    %17 = memref.load %arg7[%c0_15, %c0_16] : memref<1x1xf32, #tpu.memory_space<smem>>
    %18 = vector.broadcast %17 : f32 to vector<1x128xf32>
    %19 = arith.addf %16, %18 : vector<1x128xf32>
    %c0_17 = arith.constant 0 : index
    %c0_18 = arith.constant 0 : index
    %20 = vector.load %arg8[%c0_17, %c0_18] : memref<1x128xf32, #tpu.memory_space<vmem>>, vector<1x128xf32>
    tpu.vector_store %arg8[%c0_17, %c0_18], %19 {strides = array<i32>} : memref<1x128xf32, #tpu.memory_space<vmem>>, vector<1x128xf32>,
    return
  }
  func.func @transform_0(%arg0: i32) -> (i32, i32) {
    %c0_i32 = arith.constant 0 : i32
    %c0_i32_0 = arith.constant 0 : i32
    return %c0_i32, %arg0 : i32, i32
  }
  func.func @transform_1(%arg0: i32) -> (i32, i32) {
    %c0_i32 = arith.constant 0 : i32
    %c0_i32_0 = arith.constant 0 : i32
    %c0_i32_1 = arith.constant 0 : i32
    return %c0_i32, %c0_i32_0 : i32, i32
  }
  func.func @transform_2(%arg0: i32) -> (i32, i32) {
    %c0_i32 = arith.constant 0 : i32
    %c0_i32_0 = arith.constant 0 : i32
    %c0_i32_1 = arith.constant 0 : i32
    return %c0_i32, %c0_i32_0 : i32, i32
  }
  func.func @transform_3(%arg0: i32) -> (i32, i32) {
    %c0_i32 = arith.constant 0 : i32
    %c0_i32_0 = arith.constant 0 : i32
    %c0_i32_1 = arith.constant 0 : i32
    return %c0_i32, %c0_i32_0 : i32, i32
  }
  func.func @transform_4(%arg0: i32) -> (i32, i32) {
    %c0_i32 = arith.constant 0 : i32
    %c0_i32_0 = arith.constant 0 : i32
    %c0_i32_1 = arith.constant 0 : i32
    return %c0_i32, %c0_i32_0 : i32, i32
  }
  func.func @transform_5(%arg0: i32) -> (i32, i32) {
    %c0_i32 = arith.constant 0 : i32
    %c0_i32_0 = arith.constant 0 : i32
    %c0_i32_1 = arith.constant 0 : i32
    return %c0_i32, %c0_i32_0 : i32, i32
  }
  func.func @transform_6(%arg0: i32) -> (i32, i32) {
    %c0_i32 = arith.constant 0 : i32
    %c0_i32_0 = arith.constant 0 : i32
    %c0_i32_1 = arith.constant 0 : i32
    return %c0_i32, %c0_i32_0 : i32, i32
  }
  func.func @transform_7(%arg0: i32) -> (i32, i32) {
    %c0_i32 = arith.constant 0 : i32
    %c0_i32_0 = arith.constant 0 : i32
    return %c0_i32, %arg0 : i32, i32
  }
}

</mosaic_0001>

<llo_original>
// kernel: improved_dlinear_forward.1
$region0: #{improved_dlinear_forward.1}
  #allocation0 [shape = 'u32[]', space=smem, size = 0x4, offset = 0x4, fixed_abs, tag = 'smem constant byte address 0x4 - core index']
  #allocation1 [shape = 'u32[144,128]{1,0:T(1,128)}', space=vmem, size = 0x12000, scoped, tag = 'internal scratch']
  #allocation2 [shape = 'f32[1,1]{1,0:T(1,128)S(6)}', space=smem, size = 0x200, scoped, tag = 'scoped memory for improved_dlinear_forward.1']
  %s0 = inlined_call_operand.vmem [shape: f32[8,128], index: 0, kind: input, shape index: {}]
  %s1 = inlined_call_operand.vmem [shape: f32[128,8], index: 1, kind: input, shape index: {}]
  %s2 = inlined_call_operand.vmem [shape: f32[128,1], index: 2, kind: input, shape index: {}]
  %s3 = inlined_call_operand.vmem [shape: f32[64,128], index: 3, kind: input, shape index: {}]
  %s4 = inlined_call_operand.vmem [shape: f32[64,1], index: 4, kind: input, shape index: {}]
  %s5 = inlined_call_operand.vmem [shape: f32[1,64], index: 5, kind: input, shape index: {}]
  %s6 = inlined_call_operand.<no memory space> [shape: f32[1,1], index: 6, kind: input, shape index: {}]
  %s7 = inlined_call_operand.vmem [shape: f32[1,128], index: 7, kind: output, shape index: {}]
  %s8 = sld [smem:[#allocation0]]
  $region38: #{improved_dlinear_forward.1} parent=0
    _
  %s10 = ssub.s32 1, %s8
  %s11 = scalar_select 0, %s10, %s8
  %12 = sst [smem:[#allocation2]] %s6
  // Predicated region
  $region2: #{improved_dlinear_forward.1} parent=0 // pred_check
    _
  $region3: #{improved_dlinear_forward.1} parent=0 // pred_check_branch
    %14 = sbr.rel (0) target = $region5
  $region4: #{improved_dlinear_forward.1} parent=0 // pred_region
    _
  $region5: #{improved_dlinear_forward.1} parent=0 // pred_fallthru
    _
  // Predicated region
  $region6: #{improved_dlinear_forward.1} parent=0 // pred_check
    _
  $region7: #{improved_dlinear_forward.1} parent=0 // pred_check_branch
    %16 = sbr.rel (0) target = $region9
  $region8: #{improved_dlinear_forward.1} parent=0 // pred_region
    _
  $region9: #{improved_dlinear_forward.1} parent=0 // pred_fallthru
    _
  // Predicated region
  $region10: #{improved_dlinear_forward.1} parent=0 // pred_check
    _
  $region11: #{improved_dlinear_forward.1} parent=0 // pred_check_branch
    %18 = sbr.rel (0) target = $region13
  $region12: #{improved_dlinear_forward.1} parent=0 // pred_region
    _
  $region13: #{improved_dlinear_forward.1} parent=0 // pred_fallthru
    _
  // Predicated region
  $region14: #{improved_dlinear_forward.1} parent=0 // pred_check
    _
  $region15: #{improved_dlinear_forward.1} parent=0 // pred_check_branch
    %20 = sbr.rel (0) target = $region17
  $region16: #{improved_dlinear_forward.1} parent=0 // pred_region
    _
  $region17: #{improved_dlinear_forward.1} parent=0 // pred_fallthru
    _
  // Predicated region
  $region18: #{improved_dlinear_forward.1} parent=0 // pred_check
    _
  $region19: #{improved_dlinear_forward.1} parent=0 // pred_check_branch
    %22 = sbr.rel (0) target = $region21
  $region20: #{improved_dlinear_forward.1} parent=0 // pred_region
    _
  $region21: #{improved_dlinear_forward.1} parent=0 // pred_fallthru
    _
  // Predicated region
  $region22: #{improved_dlinear_forward.1} parent=0 // pred_check
    _
  $region23: #{improved_dlinear_forward.1} parent=0 // pred_check_branch
    %24 = sbr.rel (0) target = $region25
  $region24: #{improved_dlinear_forward.1} parent=0 // pred_region
    _
  $region25: #{improved_dlinear_forward.1} parent=0 // pred_fallthru
    _
  // Predicated region
  $region26: #{improved_dlinear_forward.1} parent=0 // pred_check
    _
  $region27: #{improved_dlinear_forward.1} parent=0 // pred_check_branch
    %26 = sbr.rel (0) target = $region29
  $region28: #{improved_dlinear_forward.1} parent=0 // pred_region
    _
  $region29: #{improved_dlinear_forward.1} parent=0 // pred_fallthru
    _
  %v27 = vld [vmem:[%s1] sm:$0xff]
  %v28 = vld [vmem:[%s1 + $0x8] sm:$0xff]
  %v29 = vld [vmem:[%s1 + $0x10] sm:$0xff]
  %v30 = vld [vmem:[%s1 + $0x18] sm:$0xff]
  %v31 = vld [vmem:[%s1 + $0x20] sm:$0xff]
  %v32 = vld [vmem:[%s1 + $0x28] sm:$0xff]
  %v33 = vld [vmem:[%s1 + $0x30] sm:$0xff]
  %v34 = vld [vmem:[%s1 + $0x38] sm:$0xff]
  %v35 = vld [vmem:[%s1 + $0x40] sm:$0xff]
  %v36 = vld [vmem:[%s1 + $0x48] sm:$0xff]
  %v37 = vld [vmem:[%s1 + $0x50] sm:$0xff]
  %v38 = vld [vmem:[%s1 + $0x58] sm:$0xff]
  %v39 = vld [vmem:[%s1 + $0x60] sm:$0xff]
  %v40 = vld [vmem:[%s1 + $0x68] sm:$0xff]
  %v41 = vld [vmem:[%s1 + $0x70] sm:$0xff]
  %v42 = vld [vmem:[%s1 + $0x78] sm:$0xff]
  %v43 = vld [vmem:[%s0] sm:$0xff]
  %v44 = vld [vmem:[%s2] sm:$0xff]
  %v45 = vld [vmem:[%s2 + $0x8] sm:$0xff]
  %v46 = vld [vmem:[%s2 + $0x10] sm:$0xff]
  %v47 = vld [vmem:[%s2 + $0x18] sm:$0xff]
  %v48 = vld [vmem:[%s2 + $0x20] sm:$0xff]
  %v49 = vld [vmem:[%s2 + $0x28] sm:$0xff]
  %v50 = vld [vmem:[%s2 + $0x30] sm:$0xff]
  %v51 = vld [vmem:[%s2 + $0x38] sm:$0xff]
  %v52 = vld [vmem:[%s2 + $0x40] sm:$0xff]
  %v53 = vld [vmem:[%s2 + $0x48] sm:$0xff]
  %v54 = vld [vmem:[%s2 + $0x50] sm:$0xff]
  %v55 = vld [vmem:[%s2 + $0x58] sm:$0xff]
  %v56 = vld [vmem:[%s2 + $0x60] sm:$0xff]
  %v57 = vld [vmem:[%s2 + $0x68] sm:$0xff]
  %v58 = vld [vmem:[%s2 + $0x70] sm:$0xff]
  %v59 = vld [vmem:[%s2 + $0x78] sm:$0xff]
  %61 = vset.pattern.permute.xlu0 0
  %62 = vperm.xlu0 %61, %v44
  %v63 = vpop.permute.xlu0 %62
  %66 = vset.pattern.permute.xlu0 0
  %67 = vperm.xlu0 %66, %v45
  %v68 = vpop.permute.xlu0 %67
  %71 = vset.pattern.permute.xlu0 0
  %72 = vperm.xlu0 %71, %v46
  %v73 = vpop.permute.xlu0 %72
  %76 = vset.pattern.permute.xlu0 0
  %77 = vperm.xlu0 %76, %v47
  %v78 = vpop.permute.xlu0 %77
  %81 = vset.pattern.permute.xlu0 0
  %82 = vperm.xlu0 %81, %v48
  %v83 = vpop.permute.xlu0 %82
  %86 = vset.pattern.permute.xlu0 0
  %87 = vperm.xlu0 %86, %v49
  %v88 = vpop.permute.xlu0 %87
  %91 = vset.pattern.permute.xlu0 0
  %92 = vperm.xlu0 %91, %v50
  %v93 = vpop.permute.xlu0 %92
  %96 = vset.pattern.permute.xlu0 0
  %97 = vperm.xlu0 %96, %v51
  %v98 = vpop.permute.xlu0 %97
  %101 = vset.pattern.permute.xlu0 0
  %102 = vperm.xlu0 %101, %v52
  %v103 = vpop.permute.xlu0 %102
  %106 = vset.pattern.permute.xlu0 0
  %107 = vperm.xlu0 %106, %v53
  %v108 = vpop.permute.xlu0 %107
  %111 = vset.pattern.permute.xlu0 0
  %112 = vperm.xlu0 %111, %v54
  %v113 = vpop.permute.xlu0 %112
  %116 = vset.pattern.permute.xlu0 0
  %117 = vperm.xlu0 %116, %v55
  %v118 = vpop.permute.xlu0 %117
  %121 = vset.pattern.permute.xlu0 0
  %122 = vperm.xlu0 %121, %v56
  %v123 = vpop.permute.xlu0 %122
  %126 = vset.pattern.permute.xlu0 0
  %127 = vperm.xlu0 %126, %v57
  %v128 = vpop.permute.xlu0 %127
  %131 = vset.pattern.permute.xlu0 0
  %132 = vperm.xlu0 %131, %v58
  %v133 = vpop.permute.xlu0 %132
  %136 = vset.pattern.permute.xlu0 0
  %137 = vperm.xlu0 %136, %v59
  %v138 = vpop.permute.xlu0 %137
  %vm140 = vcmask 64512
  %v142 = vsel %vm140, %v27, 0
  %v145 = vsel %vm140, %v28, 0
  %v148 = vsel %vm140, %v29, 0
  %v151 = vsel %vm140, %v30, 0
  %v154 = vsel %vm140, %v31, 0
  %v157 = vsel %vm140, %v32, 0
  %v160 = vsel %vm140, %v33, 0
  %v163 = vsel %vm140, %v34, 0
  %v166 = vsel %vm140, %v35, 0
  %v169 = vsel %vm140, %v36, 0
  %v172 = vsel %vm140, %v37, 0
  %v175 = vsel %vm140, %v38, 0
  %v178 = vsel %vm140, %v39, 0
  %v181 = vsel %vm140, %v40, 0
  %v184 = vsel %vm140, %v41, 0
  %v187 = vsel %vm140, %v42, 0
  %189 = vmatprep.subr.mxu0 0.0
  %190 = vmatpush1.msra.mxu0 %v43
  %191 = vmatprep.subr.mxu0 0.0
  %192 = vmatpush1.msra.mxu0 0.0
  %193 = vmatprep.subr.mxu0 0.0
  %194 = vmatpush1.msra.mxu0 0.0
  %195 = vmatprep.subr.mxu0 0.0
  %196 = vmatpush1.msra.mxu0 0.0
  %197 = vmatprep.subr.mxu0 0.0
  %198 = vmatpush1.msra.mxu0 0.0
  %199 = vmatprep.subr.mxu0 0.0
  %200 = vmatpush1.msra.mxu0 0.0
  %201 = vmatprep.subr.mxu0 0.0
  %202 = vmatpush1.msra.mxu0 0.0
  %203 = vmatprep.subr.mxu0 0.0
  %204 = vmatpush1.msra.mxu0 0.0
  %205 = vmatprep.subr.mxu0 0.0
  %206 = vmatpush1.msra.mxu0 0.0
  %207 = vmatprep.subr.mxu0 0.0
  %208 = vmatpush1.msra.mxu0 0.0
  %209 = vmatprep.subr.mxu0 0.0
  %210 = vmatpush1.msra.mxu0 0.0
  %211 = vmatprep.subr.mxu0 0.0
  %212 = vmatpush1.msra.mxu0 0.0
  %213 = vmatprep.subr.mxu0 0.0
  %214 = vmatpush1.msra.mxu0 0.0
  %215 = vmatprep.subr.mxu0 0.0
  %216 = vmatpush1.msra.mxu0 0.0
  %217 = vmatprep.subr.mxu0 0.0
  %218 = vmatpush1.msra.mxu0 0.0
  %219 = vmatprep.subr.mxu0 0.0
  %220 = vmatpush1.msra.mxu0 0.0
  %221 = vmatprep.subr.mxu0 0.0
  %222 = vmatpush1.msra.mxu0 0.0
  %223 = vmatprep.subr.mxu0 0.0
  %224 = vmatpush1.msra.mxu0 0.0
  %225 = vmatprep.subr.mxu0 0.0
  %226 = vmatpush1.msra.mxu0 0.0
  %227 = vmatprep.subr.mxu0 0.0
  %228 = vmatpush1.msra.mxu0 0.0
  %229 = vmatprep.subr.mxu0 0.0
  %230 = vmatpush1.msra.mxu0 0.0
  %231 = vmatprep.subr.mxu0 0.0
  %232 = vmatpush1.msra.mxu0 0.0
  %233 = vmatprep.subr.mxu0 0.0
  %234 = vmatpush1.msra.mxu0 0.0
  %235 = vmatprep.subr.mxu0 0.0
  %236 = vmatpush1.msra.mxu0 0.0
  %237 = vmatprep.subr.mxu0 0.0
  %238 = vmatpush1.msra.mxu0 0.0
  %239 = vmatprep.subr.mxu0 0.0
  %240 = vmatpush1.msra.mxu0 0.0
  %241 = vmatprep.subr.mxu0 0.0
  %242 = vmatpush1.msra.mxu0 0.0
  %243 = vmatprep.subr.mxu0 0.0
  %244 = vmatpush1.msra.mxu0 0.0
  %245 = vmatprep.subr.mxu0 0.0
  %246 = vmatpush1.msra.mxu0 0.0
  %247 = vmatprep.subr.mxu0 0.0
  %248 = vmatpush1.msra.mxu0 0.0
  %249 = vmatprep.subr.mxu0 0.0
  %250 = vmatpush1.msra.mxu0 0.0
  %251 = vmatprep.subr.mxu0 0.0
  %252 = vmatpush1.msra.mxu0 0.0
  %253 = vmatprep.mubr.f32.mxu0 0.0
  %254 = vmatmul.mubr.f32.gmra.mrb[0].mxu0 %v142
  %v255 = vpop.f32.mrb[0].mxu0
  %v256 = vadd.f32 %v63, %v255
  %v257 = vpop.f32.mrb[0].mxu0
  %258 = vmatprep.mubr.f32.mxu0 0.0
  %259 = vmatmul.mubr.f32.gmra.mrb[0].mxu0 %v145
  %v260 = vpop.f32.mrb[0].mxu0
  %v261 = vadd.f32 %v68, %v260
  %v262 = vpop.f32.mrb[0].mxu0
  %263 = vmatprep.mubr.f32.mxu0 0.0
  %264 = vmatmul.mubr.f32.gmra.mrb[0].mxu0 %v148
  %v265 = vpop.f32.mrb[0].mxu0
  %v266 = vadd.f32 %v73, %v265
  %v267 = vpop.f32.mrb[0].mxu0
  %268 = vmatprep.mubr.f32.mxu0 0.0
  %269 = vmatmul.mubr.f32.gmra.mrb[0].mxu0 %v151
  %v270 = vpop.f32.mrb[0].mxu0
  %v271 = vadd.f32 %v78, %v270
  %v272 = vpop.f32.mrb[0].mxu0
  %273 = vmatprep.mubr.f32.mxu0 0.0
  %274 = vmatmul.mubr.f32.gmra.mrb[0].mxu0 %v154
  %v275 = vpop.f32.mrb[0].mxu0
  %v276 = vadd.f32 %v83, %v275
  %v277 = vpop.f32.mrb[0].mxu0
  %278 = vmatprep.mubr.f32.mxu0 0.0
  %279 = vmatmul.mubr.f32.gmra.mrb[0].mxu0 %v157
  %v280 = vpop.f32.mrb[0].mxu0
  %v281 = vadd.f32 %v88, %v280
  %v282 = vpop.f32.mrb[0].mxu0
  %283 = vmatprep.mubr.f32.mxu0 0.0
  %284 = vmatmul.mubr.f32.gmra.mrb[0].mxu0 %v160
  %v285 = vpop.f32.mrb[0].mxu0
  %v286 = vadd.f32 %v93, %v285
  %v287 = vpop.f32.mrb[0].mxu0
  %288 = vmatprep.mubr.f32.mxu0 0.0
  %289 = vmatmul.mubr.f32.gmra.mrb[0].mxu0 %v163
  %v290 = vpop.f32.mrb[0].mxu0
  %v291 = vadd.f32 %v98, %v290
  %v292 = vpop.f32.mrb[0].mxu0
  %293 = vmatprep.mubr.f32.mxu0 0.0
  %294 = vmatmul.mubr.f32.gmra.mrb[0].mxu0 %v166
  %v295 = vpop.f32.mrb[0].mxu0
  %v296 = vadd.f32 %v103, %v295
  %v297 = vpop.f32.mrb[0].mxu0
  %298 = vmatprep.mubr.f32.mxu0 0.0
  %299 = vmatmul.mubr.f32.gmra.mrb[0].mxu0 %v169
  %v300 = vpop.f32.mrb[0].mxu0
  %v301 = vadd.f32 %v108, %v300
  %v302 = vpop.f32.mrb[0].mxu0
  %303 = vmatprep.mubr.f32.mxu0 0.0
  %304 = vmatmul.mubr.f32.gmra.mrb[0].mxu0 %v172
  %v305 = vpop.f32.mrb[0].mxu0
  %v306 = vadd.f32 %v113, %v305
  %v307 = vpop.f32.mrb[0].mxu0
  %308 = vmatprep.mubr.f32.mxu0 0.0
  %309 = vmatmul.mubr.f32.gmra.mrb[0].mxu0 %v175
  %v310 = vpop.f32.mrb[0].mxu0
  %v311 = vadd.f32 %v118, %v310
  %v312 = vpop.f32.mrb[0].mxu0
  %313 = vmatprep.mubr.f32.mxu0 0.0
  %314 = vmatmul.mubr.f32.gmra.mrb[0].mxu0 %v178
  %v315 = vpop.f32.mrb[0].mxu0
  %v316 = vadd.f32 %v123, %v315
  %v317 = vpop.f32.mrb[0].mxu0
  %318 = vmatprep.mubr.f32.mxu0 0.0
  %319 = vmatmul.mubr.f32.gmra.mrb[0].mxu0 %v181
  %v320 = vpop.f32.mrb[0].mxu0
  %v321 = vadd.f32 %v128, %v320
  %v322 = vpop.f32.mrb[0].mxu0
  %323 = vmatprep.mubr.f32.mxu0 0.0
  %324 = vmatmul.mubr.f32.gmra.mrb[0].mxu0 %v184
  %v325 = vpop.f32.mrb[0].mxu0
  %v326 = vadd.f32 %v133, %v325
  %v327 = vpop.f32.mrb[0].mxu0
  %328 = vmatprep.mubr.f32.mxu0 0.0
  %329 = vmatmul.mubr.f32.gmra.mrb[0].mxu0 %v187
  %v330 = vpop.f32.mrb[0].mxu0
  %v331 = vadd.f32 %v138, %v330
  %v332 = vpop.f32.mrb[0].mxu0
  %333 = vdwg.mxu0
  %v334 = vmax.f32 %v256, 0.0
  %v335 = vmax.f32 %v261, 0.0
  %v336 = vmax.f32 %v266, 0.0
  %v337 = vmax.f32 %v271, 0.0
  %v338 = vmax.f32 %v276, 0.0
  %v339 = vmax.f32 %v281, 0.0
  %v340 = vmax.f32 %v286, 0.0
  %v341 = vmax.f32 %v291, 0.0
  %v342 = vmax.f32 %v296, 0.0
  %v343 = vmax.f32 %v301, 0.0
  %v344 = vmax.f32 %v306, 0.0
  %v345 = vmax.f32 %v311, 0.0
  %v346 = vmax.f32 %v316, 0.0
  %v347 = vmax.f32 %v321, 0.0
  %v348 = vmax.f32 %v326, 0.0
  %v349 = vmax.f32 %v331, 0.0
  %v350 = vld [vmem:[%s3] sm:$0xff]
  %v351 = vld [vmem:[%s3 + $0x8] sm:$0xff]
  %v352 = vld [vmem:[%s3 + $0x10] sm:$0xff]
  %v353 = vld [vmem:[%s3 + $0x18] sm:$0xff]
  %v354 = vld [vmem:[%s3 + $0x20] sm:$0xff]
  %v355 = vld [vmem:[%s3 + $0x28] sm:$0xff]
  %v356 = vld [vmem:[%s3 + $0x30] sm:$0xff]
  %v357 = vld [vmem:[%s3 + $0x38] sm:$0xff]
  %v358 = vld [vmem:[%s4] sm:$0xff]
  %v359 = vld [vmem:[%s4 + $0x8] sm:$0xff]
  %v360 = vld [vmem:[%s4 + $0x10] sm:$0xff]
  %v361 = vld [vmem:[%s4 + $0x18] sm:$0xff]
  %v362 = vld [vmem:[%s4 + $0x20] sm:$0xff]
  %v363 = vld [vmem:[%s4 + $0x28] sm:$0xff]
  %v364 = vld [vmem:[%s4 + $0x30] sm:$0xff]
  %v365 = vld [vmem:[%s4 + $0x38] sm:$0xff]
  %367 = vset.pattern.permute.xlu0 0
  %368 = vperm.xlu0 %367, %v358
  %v369 = vpop.permute.xlu0 %368
  %372 = vset.pattern.permute.xlu0 0
  %373 = vperm.xlu0 %372, %v359
  %v374 = vpop.permute.xlu0 %373
  %377 = vset.pattern.permute.xlu0 0
  %378 = vperm.xlu0 %377, %v360
  %v379 = vpop.permute.xlu0 %378
  %382 = vset.pattern.permute.xlu0 0
  %383 = vperm.xlu0 %382, %v361
  %v384 = vpop.permute.xlu0 %383
  %387 = vset.pattern.permute.xlu0 0
  %388 = vperm.xlu0 %387, %v362
  %v389 = vpop.permute.xlu0 %388
  %392 = vset.pattern.permute.xlu0 0
  %393 = vperm.xlu0 %392, %v363
  %v394 = vpop.permute.xlu0 %393
  %397 = vset.pattern.permute.xlu0 0
  %398 = vperm.xlu0 %397, %v364
  %v399 = vpop.permute.xlu0 %398
  %402 = vset.pattern.permute.xlu0 0
  %403 = vperm.xlu0 %402, %v365
  %v404 = vpop.permute.xlu0 %403
  %406 = vmatprep.subr.mxu0 0.0
  %407 = vmatpush1.msra.mxu0 %v334
  %408 = vmatprep.subr.mxu0 0.0
  %409 = vmatpush1.msra.mxu0 %v335
  %410 = vmatprep.subr.mxu0 0.0
  %411 = vmatpush1.msra.mxu0 %v336
  %412 = vmatprep.subr.mxu0 0.0
  %413 = vmatpush1.msra.mxu0 %v337
  %414 = vmatprep.subr.mxu0 0.0
  %415 = vmatpush1.msra.mxu0 %v338
  %416 = vmatprep.subr.mxu0 0.0
  %417 = vmatpush1.msra.mxu0 %v339
  %418 = vmatprep.subr.mxu0 0.0
  %419 = vmatpush1.msra.mxu0 %v340
  %420 = vmatprep.subr.mxu0 0.0
  %421 = vmatpush1.msra.mxu0 %v341
  %422 = vmatprep.subr.mxu0 0.0
  %423 = vmatpush1.msra.mxu0 %v342
  %424 = vmatprep.subr.mxu0 0.0
  %425 = vmatpush1.msra.mxu0 %v343
  %426 = vmatprep.subr.mxu0 0.0
  %427 = vmatpush1.msra.mxu0 %v344
  %428 = vmatprep.subr.mxu0 0.0
  %429 = vmatpush1.msra.mxu0 %v345
  %430 = vmatprep.subr.mxu0 0.0
  %431 = vmatpush1.msra.mxu0 %v346
  %432 = vmatprep.subr.mxu0 0.0
  %433 = vmatpush1.msra.mxu0 %v347
  %434 = vmatprep.subr.mxu0 0.0
  %435 = vmatpush1.msra.mxu0 %v348
  %436 = vmatprep.subr.mxu0 0.0
  %437 = vmatpush1.msra.mxu0 %v349
  %438 = vmatprep.subr.mxu0 0.0
  %439 = vmatpush1.msra.mxu0 0.0
  %440 = vmatprep.subr.mxu0 0.0
  %441 = vmatpush1.msra.mxu0 0.0
  %442 = vmatprep.subr.mxu0 0.0
  %443 = vmatpush1.msra.mxu0 0.0
  %444 = vmatprep.subr.mxu0 0.0
  %445 = vmatpush1.msra.mxu0 0.0
  %446 = vmatprep.subr.mxu0 0.0
  %447 = vmatpush1.msra.mxu0 0.0
  %448 = vmatprep.subr.mxu0 0.0
  %449 = vmatpush1.msra.mxu0 0.0
  %450 = vmatprep.subr.mxu0 0.0
  %451 = vmatpush1.msra.mxu0 0.0
  %452 = vmatprep.subr.mxu0 0.0
  %453 = vmatpush1.msra.mxu0 0.0
  %454 = vmatprep.subr.mxu0 0.0
  %455 = vmatpush1.msra.mxu0 0.0
  %456 = vmatprep.subr.mxu0 0.0
  %457 = vmatpush1.msra.mxu0 0.0
  %458 = vmatprep.subr.mxu0 0.0
  %459 = vmatpush1.msra.mxu0 0.0
  %460 = vmatprep.subr.mxu0 0.0
  %461 = vmatpush1.msra.mxu0 0.0
  %462 = vmatprep.subr.mxu0 0.0
  %463 = vmatpush1.msra.mxu0 0.0
  %464 = vmatprep.subr.mxu0 0.0
  %465 = vmatpush1.msra.mxu0 0.0
  %466 = vmatprep.subr.mxu0 0.0
  %467 = vmatpush1.msra.mxu0 0.0
  %468 = vmatprep.subr.mxu0 0.0
  %469 = vmatpush1.msra.mxu0 0.0
  %470 = vmatprep.mubr.f32.mxu0 0.0
  %471 = vmatmul.mubr.f32.gmra.mrb[0].mxu0 %v350
  %v472 = vpop.f32.mrb[0].mxu0
  %v473 = vadd.f32 %v369, %v472
  %v474 = vpop.f32.mrb[0].mxu0
  %475 = vmatprep.mubr.f32.mxu0 0.0
  %476 = vmatmul.mubr.f32.gmra.mrb[0].mxu0 %v351
  %v477 = vpop.f32.mrb[0].mxu0
  %v478 = vadd.f32 %v374, %v477
  %v479 = vpop.f32.mrb[0].mxu0
  %480 = vmatprep.mubr.f32.mxu0 0.0
  %481 = vmatmul.mubr.f32.gmra.mrb[0].mxu0 %v352
  %v482 = vpop.f32.mrb[0].mxu0
  %v483 = vadd.f32 %v379, %v482
  %v484 = vpop.f32.mrb[0].mxu0
  %485 = vmatprep.mubr.f32.mxu0 0.0
  %486 = vmatmul.mubr.f32.gmra.mrb[0].mxu0 %v353
  %v487 = vpop.f32.mrb[0].mxu0
  %v488 = vadd.f32 %v384, %v487
  %v489 = vpop.f32.mrb[0].mxu0
  %490 = vmatprep.mubr.f32.mxu0 0.0
  %491 = vmatmul.mubr.f32.gmra.mrb[0].mxu0 %v354
  %v492 = vpop.f32.mrb[0].mxu0
  %v493 = vadd.f32 %v389, %v492
  %v494 = vpop.f32.mrb[0].mxu0
  %495 = vmatprep.mubr.f32.mxu0 0.0
  %496 = vmatmul.mubr.f32.gmra.mrb[0].mxu0 %v355
  %v497 = vpop.f32.mrb[0].mxu0
  %v498 = vadd.f32 %v394, %v497
  %v499 = vpop.f32.mrb[0].mxu0
  %500 = vmatprep.mubr.f32.mxu0 0.0
  %501 = vmatmul.mubr.f32.gmra.mrb[0].mxu0 %v356
  %v502 = vpop.f32.mrb[0].mxu0
  %v503 = vadd.f32 %v399, %v502
  %v504 = vpop.f32.mrb[0].mxu0
  %505 = vmatprep.mubr.f32.mxu0 0.0
  %506 = vmatmul.mubr.f32.gmra.mrb[0].mxu0 %v357
  %v507 = vpop.f32.mrb[0].mxu0
  %v508 = vadd.f32 %v404, %v507
  %v509 = vpop.f32.mrb[0].mxu0
  %510 = vdwg.mxu0
  %v511 = vmax.f32 %v473, 0.0
  %v512 = vmax.f32 %v478, 0.0
  %v513 = vmax.f32 %v483, 0.0
  %v514 = vmax.f32 %v488, 0.0
  %v515 = vmax.f32 %v493, 0.0
  %v516 = vmax.f32 %v498, 0.0
  %v517 = vmax.f32 %v503, 0.0
  %v518 = vmax.f32 %v508, 0.0
  %v519 = vld [vmem:[%s5] sm:$0x1]
  %s520 = sld [smem:[#allocation2]]
  %v521 = vstv %s520
  %vm522 = vcmask 523264
  %v524 = vsel %vm522, %v519, 0
  %526 = vmatprep.subr.mxu0 0.0
  %527 = vmatpush1.msra.mxu0 %v511
  %528 = vmatprep.subr.mxu0 0.0
  %529 = vmatpush1.msra.mxu0 %v512
  %530 = vmatprep.subr.mxu0 0.0
  %531 = vmatpush1.msra.mxu0 %v513
  %532 = vmatprep.subr.mxu0 0.0
  %533 = vmatpush1.msra.mxu0 %v514
  %534 = vmatprep.subr.mxu0 0.0
  %535 = vmatpush1.msra.mxu0 %v515
  %536 = vmatprep.subr.mxu0 0.0
  %537 = vmatpush1.msra.mxu0 %v516
  %538 = vmatprep.subr.mxu0 0.0
  %539 = vmatpush1.msra.mxu0 %v517
  %540 = vmatprep.subr.mxu0 0.0
  %541 = vmatpush1.msra.mxu0 %v518
  %542 = vmatprep.subr.mxu0 0.0
  %543 = vmatpush1.msra.mxu0 0.0
  %544 = vmatprep.subr.mxu0 0.0
  %545 = vmatpush1.msra.mxu0 0.0
  %546 = vmatprep.subr.mxu0 0.0
  %547 = vmatpush1.msra.mxu0 0.0
  %548 = vmatprep.subr.mxu0 0.0
  %549 = vmatpush1.msra.mxu0 0.0
  %550 = vmatprep.subr.mxu0 0.0
  %551 = vmatpush1.msra.mxu0 0.0
  %552 = vmatprep.subr.mxu0 0.0
  %553 = vmatpush1.msra.mxu0 0.0
  %554 = vmatprep.subr.mxu0 0.0
  %555 = vmatpush1.msra.mxu0 0.0
  %556 = vmatprep.subr.mxu0 0.0
  %557 = vmatpush1.msra.mxu0 0.0
  %558 = vmatprep.subr.mxu0 0.0
  %559 = vmatpush1.msra.mxu0 0.0
  %560 = vmatprep.subr.mxu0 0.0
  %561 = vmatpush1.msra.mxu0 0.0
  %562 = vmatprep.subr.mxu0 0.0
  %563 = vmatpush1.msra.mxu0 0.0
  %564 = vmatprep.subr.mxu0 0.0
  %565 = vmatpush1.msra.mxu0 0.0
  %566 = vmatprep.subr.mxu0 0.0
  %567 = vmatpush1.msra.mxu0 0.0
  %568 = vmatprep.subr.mxu0 0.0
  %569 = vmatpush1.msra.mxu0 0.0
  %570 = vmatprep.subr.mxu0 0.0
  %571 = vmatpush1.msra.mxu0 0.0
  %572 = vmatprep.subr.mxu0 0.0
  %573 = vmatpush1.msra.mxu0 0.0
  %574 = vmatprep.subr.mxu0 0.0
  %575 = vmatpush1.msra.mxu0 0.0
  %576 = vmatprep.subr.mxu0 0.0
  %577 = vmatpush1.msra.mxu0 0.0
  %578 = vmatprep.subr.mxu0 0.0
  %579 = vmatpush1.msra.mxu0 0.0
  %580 = vmatprep.subr.mxu0 0.0
  %581 = vmatpush1.msra.mxu0 0.0
  %582 = vmatprep.subr.mxu0 0.0
  %583 = vmatpush1.msra.mxu0 0.0
  %584 = vmatprep.subr.mxu0 0.0
  %585 = vmatpush1.msra.mxu0 0.0
  %586 = vmatprep.subr.mxu0 0.0
  %587 = vmatpush1.msra.mxu0 0.0
  %588 = vmatprep.subr.mxu0 0.0
  %589 = vmatpush1.msra.mxu0 0.0
  %590 = vmatprep.mubr.f32.mxu0 0.0
  %591 = vmatmul.mubr.f32.gmra.mrb[0].mxu0 %v524
  %v592 = vpop.f32.mrb[0].mxu0
  %v593 = vadd.f32 %v521, %v592
  %v594 = vpop.f32.mrb[0].mxu0
  %595 = vdwg.mxu0
  %596 = vst [vmem:[%s7] sm:$0x1] %v593
  // Predicated region
  $region30: #{improved_dlinear_forward.1} parent=0 // pred_check
    _
  $region31: #{improved_dlinear_forward.1} parent=0 // pred_check_branch
    %598 = sbr.rel (0) target = $region33
  $region32: #{improved_dlinear_forward.1} parent=0 // pred_region
    _
  $region33: #{improved_dlinear_forward.1} parent=0 // pred_fallthru
    _
  // Predicated region
  $region34: #{improved_dlinear_forward.1} parent=0 // pred_check
    _
  $region35: #{improved_dlinear_forward.1} parent=0 // pred_check_branch
    %600 = sbr.rel (0) target = $region37
  $region36: #{improved_dlinear_forward.1} parent=0 // pred_region
    _
  $region37: #{improved_dlinear_forward.1} parent=0 // pred_fallthru
    _

</llo_original>
